<compile_context>
chip_gen: v7x
topology: tpu7x:2x2x1
jax: 0.10.0
libtpu: 0.0.40
codegen_flags: <defaults>
</compile_context>

<pallas_src>
import functools

import jax
import jax.numpy as jnp
from jax.experimental import pallas as pl
from jax.experimental.pallas import tpu as pltpu


def _layernorm_store(e, gamma, beta, eps, out_ref):
    # e: (bt, st, H) f32. Two-pass mean/var (matches torch LayerNorm numerics).
    mean = jnp.mean(e, axis=-1, keepdims=True)
    d = e - mean                                       # `e` dies here
    var = jnp.mean(d * d, axis=-1, keepdims=True)      # biased var
    # Fold scale/shift into the store (no named `norm`/`out` f32 temporaries).
    out_ref[...] = (d * jax.lax.rsqrt(var + eps) * gamma + beta).astype(out_ref.dtype)


def _embeddings_kernel(x_ref, loc_ref, gamma_ref, beta_ref, out_ref, *, eps):
    # x_ref: (bt, st, H); loc_ref: (1, st, H) shared location rows (broadcast over batch).
    e = x_ref[...].astype(jnp.float32) + loc_ref[...].astype(jnp.float32)
    _layernorm_store(e, gamma_ref[...].astype(jnp.float32),
                     beta_ref[...].astype(jnp.float32), eps, out_ref)


def _embeddings_gather_kernel(ids_ref, x_ref, table_ref, gamma_ref, beta_ref, out_ref, *, eps):
    # ids_ref: (bt, st) int32 location ids; table_ref: (L, H) VMEM-resident location table.
    bt, st, H = x_ref.shape
    L = table_ref.shape[0]
    ids = ids_ref[...]
    iota = jax.lax.broadcasted_iota(jnp.int32, (bt, st, L), 2)
    onehot = (iota == ids[:, :, None]).astype(jnp.float32)          # (bt, st, L)
    table = table_ref[...].astype(jnp.float32)                      # (L, H)
    # One-hot gather on the (otherwise idle) MXU: exact row copies, no extra HBM traffic.
    loc = jnp.dot(onehot.reshape(bt * st, L), table,
                  preferred_element_type=jnp.float32).reshape(bt, st, H)
    e = x_ref[...].astype(jnp.float32) + loc
    _layernorm_store(e, gamma_ref[...].astype(jnp.float32),
                     beta_ref[...].astype(jnp.float32), eps, out_ref)


def _vmem_capacity_bytes():
    try:
        cap = getattr(pltpu.get_tpu_info(), "vmem_capacity_bytes", None)
        if cap:
            return int(cap)
    except Exception:
        pass
    return 64 * 1024 * 1024   # conservative fallback (v7x per-core VMEM)


def _choose_tiles(B, S, H, L, in_item, out_item, tbl_item, gather, budget_bytes,
                  target_steps=8):
    """Pick (bt | B, st | S) so the (bt, st, H) block (double-buffered in/out + loc +
    f32 temporaries) fits `budget_bytes`, maximizing (min(steps, target_steps), block_bytes)."""
    sublane = {4: 8, 2: 16, 1: 32}.get(in_item, 8)
    st_cands = [d for d in range(1, S + 1) if S % d == 0 and (d == S or d % sublane == 0)]
    bt_cands = [d for d in range(1, B + 1) if B % d == 0]
    if gather:
        # location_ids blocks are (bt, st): last dim must be %128 (or full S),
        # second-to-last %8 (or full B).
        st_cands = [d for d in st_cands if d == S or d % 128 == 0]
        bt_cands = [d for d in bt_cands if d == B or d % 8 == 0]

    def footprint(bt, st):
        blk = bt * st * H
        fp = blk * (2 * in_item + 2 * out_item)      # double-buffered input + output blocks
        fp += 3 * blk * 4                            # f32 temporaries (e/d, scaled store, ...)
        if gather:
            fp += 2 * L * H * tbl_item               # VMEM-resident table (pipeline buffers)
            fp += 2 * bt * st * 4                    # ids blocks
            fp += bt * st * L * 4 + blk * 4          # one-hot + gathered-loc temporaries
        else:
            fp += 2 * st * H * tbl_item              # shared location-row block
        return fp

    best_key, best_bt, best_st = None, min(bt_cands), min(st_cands)
    for bt in bt_cands:
        for st in st_cands:
            if footprint(bt, st) > budget_bytes:
                continue
            steps = (B // bt) * (S // st)
            key = (min(steps, target_steps), bt * st * H * in_item)
            if best_key is None or key > best_key:
                best_key, best_bt, best_st = key, bt, st
    # If nothing fits the budget (pathological), fall back to the smallest tile and let
    # the explicit vmem_limit absorb it.
    # TODO(synk): tile along H as well if even the smallest (bt, st, H) block exceeds VMEM.
    return best_bt, best_st, footprint(best_bt, best_st)


def bert_embeddings(inputs_embeds, loc_table, gamma, beta, *, eps=1e-12, location_ids=None):
    """Pallas implementation of BertEmbeddings.forward.

    inputs_embeds: (B, S, H)
    loc_table:     (seq_length, H) nn.Embedding weight
    gamma, beta:   (H,) LayerNorm params
    location_ids:  optional (S,) or (B, S) int ids into loc_table
    """
    B, S, H = inputs_embeds.shape
    L = loc_table.shape[0]
    assert S <= L, "sequence length exceeds location-embedding table"

    in_item = jnp.dtype(inputs_embeds.dtype).itemsize
    out_item = in_item
    tbl_item = jnp.dtype(loc_table.dtype).itemsize
    gather = location_ids is not None

    cap = _vmem_capacity_bytes()
    budget = min(cap // 2, 64 * 1024 * 1024)          # ~32 MiB on v7x, ~64 MiB on v5e/v6e
    bt, st, needed = _choose_tiles(B, S, H, L, in_item, out_item, tbl_item, gather, budget)
    grid = (B // bt, S // st)

    gamma3 = gamma.reshape(1, 1, H)
    beta3 = beta.reshape(1, 1, H)

    # Explicit VMEM limit: load-bearing on v5e (16 MiB default scoped VMEM), safe on v7x.
    vmem_limit = int(min(cap * 3 // 4, max(needed + (8 << 20), 32 << 20)))

    compiler_params = pltpu.CompilerParams(
        dimension_semantics=("parallel", "parallel"),
        vmem_limit_bytes=vmem_limit,
    )

    x_spec = pl.BlockSpec((bt, st, H), lambda b, s: (b, s, 0))
    out_spec = pl.BlockSpec((bt, st, H), lambda b, s: (b, s, 0))
    gb_spec = pl.BlockSpec((1, 1, H), lambda b, s: (0, 0, 0))

    if not gather:
        # Default path: location_ids == arange(S) for every batch row, so the "gather" is
        # just the first S rows, kept resident in VMEM and broadcast over the batch tile.
        loc = loc_table[:S][None]                                     # (1, S, H)
        kernel = functools.partial(_embeddings_kernel, eps=eps)
        return pl.pallas_call(
            kernel,
            out_shape=jax.ShapeDtypeStruct((B, S, H), inputs_embeds.dtype),
            grid_spec=pltpu.PrefetchScalarGridSpec(
                num_scalar_prefetch=0,
                grid=grid,
                in_specs=[
                    x_spec,
                    pl.BlockSpec((1, st, H), lambda b, s: (0, s, 0)),  # location rows
                    gb_spec,                                           # gamma
                    gb_spec,                                           # beta
                ],
                out_specs=out_spec,
            ),
            compiler_params=compiler_params,
        )(inputs_embeds, loc, gamma3, beta3)

    # Custom location_ids: gather rows in-kernel from the VMEM-resident table via a one-hot
    # MXU matmul, instead of streaming a second (B, S, H) gathered operand from HBM.
    location_ids = jnp.asarray(location_ids)
    if location_ids.ndim == 1:
        location_ids = jnp.broadcast_to(location_ids[None, :], (B, S))
    location_ids = location_ids.astype(jnp.int32)

    kernel = functools.partial(_embeddings_gather_kernel, eps=eps)
    return pl.pallas_call(
        kernel,
        out_shape=jax.ShapeDtypeStruct((B, S, H), inputs_embeds.dtype),
        grid_spec=pltpu.PrefetchScalarGridSpec(
            num_scalar_prefetch=0,
            grid=grid,
            in_specs=[
                pl.BlockSpec((bt, st), lambda b, s: (b, s)),           # location ids
                x_spec,
                pl.BlockSpec((L, H), lambda b, s: (0, 0)),             # full table, resident
                gb_spec,                                               # gamma
                gb_spec,                                               # beta
            ],
            out_specs=out_spec,
        ),
        compiler_params=compiler_params,
    )(location_ids, inputs_embeds, loc_table, gamma3, beta3)


def _reference(inputs_embeds, loc_table, gamma, beta, eps, location_ids=None):
    B, S, H = inputs_embeds.shape
    if location_ids is None:
        loc = loc_table[:S][None]
    else:
        if location_ids.ndim == 1:
            location_ids = jnp.broadcast_to(location_ids[None, :], (B, S))
        loc = loc_table[location_ids]
    e = inputs_embeds.astype(jnp.float32) + loc.astype(jnp.float32)
    mean = jnp.mean(e, axis=-1, keepdims=True)
    var = jnp.mean((e - mean) ** 2, axis=-1, keepdims=True)
    return (e - mean) / jnp.sqrt(var + eps) * gamma + beta


if __name__ == "__main__":
    # config: seq_length=8, hidden_size=32, layer_norm_eps=1e-12, hidden_dropout_prob=0.1
    B, S, H = 2, 8, 32
    eps = 1e-12

    key = jax.random.PRNGKey(0)
    k_x, k_loc = jax.random.split(key)

    inputs_embeds = jax.random.normal(k_x, (B, S, H), dtype=jnp.float32)
    loc_table = jax.random.normal(k_loc, (S, H), dtype=jnp.float32)   # nn.Embedding weight
    gamma = jnp.ones((H,), dtype=jnp.float32)                         # LayerNorm weight init
    beta = jnp.zeros((H,), dtype=jnp.float32)                         # LayerNorm bias init

    # Default path (location_ids = arange(S))
    out = jax.block_until_ready(bert_embeddings(inputs_embeds, loc_table, gamma, beta, eps=eps))
    ref = _reference(inputs_embeds, loc_table, gamma, beta, eps)
    assert out.shape == (B, S, H)
    assert jnp.allclose(out, ref, atol=1e-5, rtol=1e-5), float(jnp.max(jnp.abs(out - ref)))

    # Custom per-batch location_ids path (in-kernel one-hot gather)
    loc_ids = jnp.stack([jnp.arange(S), jnp.arange(S)[::-1]]).astype(jnp.int32)
    out2 = jax.block_until_ready(
        bert_embeddings(inputs_embeds, loc_table, gamma, beta, eps=eps, location_ids=loc_ids))
    ref2 = _reference(inputs_embeds, loc_table, gamma, beta, eps, location_ids=loc_ids)
    assert jnp.allclose(out2, ref2, atol=1e-5, rtol=1e-5), float(jnp.max(jnp.abs(out2 - ref2)))

    print("KERNEL_OK")
</pallas_src>

<mosaic_0001>
module attributes {stable_mosaic.version = 11 : i64} {
  func.func @_embeddings_kernel(%arg0: i32, %arg1: i32, %arg2: memref<1x8x32xf32, #tpu.memory_space<vmem>>, %arg3: memref<1x8x32xf32, #tpu.memory_space<vmem>>, %arg4: memref<1x1x32xf32, #tpu.memory_space<vmem>>, %arg5: memref<1x1x32xf32, #tpu.memory_space<vmem>>, %arg6: memref<1x8x32xf32, #tpu.memory_space<vmem>>) attributes {dimension_semantics = [#tpu.dimension_semantics<parallel>, #tpu.dimension_semantics<parallel>], iteration_bounds = array<i64: 2, 1>, scalar_prefetch = 0 : i64, scratch_operands = 0 : i64, tpu.core_type = #tpu.core_type<tc>, window_params = [{transform_indices = @transform_0, window_bounds = array<i64: 1, 8, 32>}, {transform_indices = @transform_1, window_bounds = array<i64: 1, 8, 32>}, {pipeline_mode = #tpu.pipeline_mode<synchronous>, transform_indices = @transform_2, window_bounds = array<i64: 1, 1, 32>}, {pipeline_mode = #tpu.pipeline_mode<synchronous>, transform_indices = @transform_3, window_bounds = array<i64: 1, 1, 32>}, {transform_indices = @transform_4, window_bounds = array<i64: 1, 8, 32>}]} {
    %c0 = arith.constant 0 : index
    %c0_0 = arith.constant 0 : index
    %c0_1 = arith.constant 0 : index
    %0 = vector.load %arg2[%c0, %c0_0, %c0_1] : memref<1x8x32xf32, #tpu.memory_space<vmem>>, vector<1x8x32xf32>
    %c0_2 = arith.constant 0 : index
    %c0_3 = arith.constant 0 : index
    %c0_4 = arith.constant 0 : index
    %1 = vector.load %arg3[%c0_2, %c0_3, %c0_4] : memref<1x8x32xf32, #tpu.memory_space<vmem>>, vector<1x8x32xf32>
    %2 = arith.addf %0, %1 : vector<1x8x32xf32>
    %c0_5 = arith.constant 0 : index
    %c0_6 = arith.constant 0 : index
    %c0_7 = arith.constant 0 : index
    %3 = vector.load %arg4[%c0_5, %c0_6, %c0_7] : memref<1x1x32xf32, #tpu.memory_space<vmem>>, vector<1x1x32xf32>
    %c0_8 = arith.constant 0 : index
    %c0_9 = arith.constant 0 : index
    %c0_10 = arith.constant 0 : index
    %4 = vector.load %arg5[%c0_8, %c0_9, %c0_10] : memref<1x1x32xf32, #tpu.memory_space<vmem>>, vector<1x1x32xf32>
    %cst = arith.constant dense<0.000000e+00> : vector<1x8xf32>
    %5 = vector.multi_reduction <add>, %2, %cst [2] : vector<1x8x32xf32> to vector<1x8xf32>
    %6 = vector.shape_cast %5 : vector<1x8xf32> to vector<1x8x1xf32>
    %cst_11 = arith.constant 3.200000e+01 : f32
    %7 = vector.broadcast %cst_11 : f32 to vector<1x8x1xf32>
    %8 = arith.divf %6, %7 : vector<1x8x1xf32>
    %9 = vector.broadcast %8 : vector<1x8x1xf32> to vector<1x8x32xf32>
    %10 = arith.subf %2, %9 : vector<1x8x32xf32>
    %11 = arith.mulf %10, %10 : vector<1x8x32xf32>
    %cst_12 = arith.constant dense<0.000000e+00> : vector<1x8xf32>
    %12 = vector.multi_reduction <add>, %11, %cst_12 [2] : vector<1x8x32xf32> to vector<1x8xf32>
    %13 = vector.shape_cast %12 : vector<1x8xf32> to vector<1x8x1xf32>
    %cst_13 = arith.constant 3.200000e+01 : f32
    %14 = vector.broadcast %cst_13 : f32 to vector<1x8x1xf32>
    %15 = arith.divf %13, %14 : vector<1x8x1xf32>
    %cst_14 = arith.constant 9.99999996E-13 : f32
    %16 = vector.broadcast %cst_14 : f32 to vector<1x8x1xf32>
    %17 = arith.addf %15, %16 : vector<1x8x1xf32>
    %18 = math.rsqrt %17 : vector<1x8x1xf32>
    %19 = vector.broadcast %18 : vector<1x8x1xf32> to vector<1x8x32xf32>
    %20 = arith.mulf %10, %19 : vector<1x8x32xf32>
    %21 = vector.broadcast %3 : vector<1x1x32xf32> to vector<1x8x32xf32>
    %22 = arith.mulf %20, %21 : vector<1x8x32xf32>
    %23 = vector.broadcast %4 : vector<1x1x32xf32> to vector<1x8x32xf32>
    %24 = arith.addf %22, %23 : vector<1x8x32xf32>
    %c0_15 = arith.constant 0 : index
    %c0_16 = arith.constant 0 : index
    %c0_17 = arith.constant 0 : index
    %25 = vector.load %arg6[%c0_15, %c0_16, %c0_17] : memref<1x8x32xf32, #tpu.memory_space<vmem>>, vector<1x8x32xf32>
    tpu.vector_store %arg6[%c0_15, %c0_16, %c0_17], %24 {strides = array<i32>} : memref<1x8x32xf32, #tpu.memory_space<vmem>>, vector<1x8x32xf32>,
    return
  }
  func.func @transform_0(%arg0: i32, %arg1: i32) -> (i32, i32, i32) {
    %c0_i32 = arith.constant 0 : i32
    %c0_i32_0 = arith.constant 0 : i32
    return %arg0, %arg1, %c0_i32 : i32, i32, i32
  }
  func.func @transform_1(%arg0: i32, %arg1: i32) -> (i32, i32, i32) {
    %c0_i32 = arith.constant 0 : i32
    %c0_i32_0 = arith.constant 0 : i32
    %c0_i32_1 = arith.constant 0 : i32
    return %c0_i32, %arg1, %c0_i32_0 : i32, i32, i32
  }
  func.func @transform_2(%arg0: i32, %arg1: i32) -> (i32, i32, i32) {
    %c0_i32 = arith.constant 0 : i32
    %c0_i32_0 = arith.constant 0 : i32
    %c0_i32_1 = arith.constant 0 : i32
    %c0_i32_2 = arith.constant 0 : i32
    return %c0_i32, %c0_i32_0, %c0_i32_1 : i32, i32, i32
  }
  func.func @transform_3(%arg0: i32, %arg1: i32) -> (i32, i32, i32) {
    %c0_i32 = arith.constant 0 : i32
    %c0_i32_0 = arith.constant 0 : i32
    %c0_i32_1 = arith.constant 0 : i32
    %c0_i32_2 = arith.constant 0 : i32
    return %c0_i32, %c0_i32_0, %c0_i32_1 : i32, i32, i32
  }
  func.func @transform_4(%arg0: i32, %arg1: i32) -> (i32, i32, i32) {
    %c0_i32 = arith.constant 0 : i32
    %c0_i32_0 = arith.constant 0 : i32
    return %arg0, %arg1, %c0_i32 : i32, i32, i32
  }
}

</mosaic_0001>

<llo_original>
// kernel: tpu_custom_call.1
$region0: #{tpu_custom_call.1}
  #allocation0 [shape = 'u32[]', space=smem, size = 0x4, offset = 0x4, fixed_abs, tag = 'smem constant byte address 0x4 - core index']
  #allocation1 [shape = 'u32[144,128]{1,0:T(1,128)}', space=vmem, size = 0x12000, scoped, tag = 'internal scratch']
  %s0 = inlined_call_operand.hbm [shape: f32[2,8,32], index: 0, kind: input, shape index: {}]
  %s1 = inlined_call_operand.hbm [shape: f32[1,8,32], index: 1, kind: input, shape index: {}]
  %s2 = inlined_call_operand.vmem [shape: f32[1,1,32], index: 2, kind: input, shape index: {}]
  %s3 = inlined_call_operand.vmem [shape: f32[1,1,32], index: 3, kind: input, shape index: {}]
  %s4 = inlined_call_operand.hbm [shape: f32[2,8,32], index: 4, kind: output, shape index: {}]
  %s5 = sld [smem:[#allocation0]]
  $region57: #{tpu_custom_call.1} parent=0
    _
  %s7 = ssub.s32 1, %s5
  %s8 = scalar_select 0, %s7, %s5
  $region1: #{tpu_custom_call.1} parent=0
    #allocation2 [shape = 'u8[8192]{0}', space=vmem, size = 0x2000, scoped, tag = 'input window, operand 0']
    #allocation3 [shape = 's32[2]{0}', space=sflag, size = 0x8, scoped, tag = 'scoped memory for tpu_custom_call.1']
    #allocation4 [shape = 's32[2]{0}', space=sflag, size = 0x8, scoped, tag = 'scoped memory for tpu_custom_call.1']
    #allocation5 [shape = 'u8[4096]{0}', space=vmem, size = 0x1000, scoped, tag = 'input window, operand 1, single buffered']
    #allocation6 [shape = 's32[1]{0}', space=sflag, size = 0x4, scoped, tag = 'scoped memory for tpu_custom_call.1']
    #allocation7 [shape = 'u8[8192]{0}', space=vmem, size = 0x2000, scoped, tag = 'output window, operand 0']
    %9 = vsyncpa [#allocation3], 0
    %s10 = scalar_lea.sflag [#allocation3], 1
    %11 = vsyncpa %s10, 0
    %12 = vsyncpa [#allocation6], 0
    %13 = vsyncpa [#allocation4], 0
    %s14 = scalar_lea.sflag [#allocation4], 1
    %15 = vsyncpa %s14, 0
    loop: start=0, step=1, limit=4
    $region2: #{tpu_custom_call.1} parent=1 // loop_pre_header
      _
    $region3: #{tpu_custom_call.1} parent=1 // loop_header
      %s17 = sphi 0, %s21
      %p18 = scmp.ge.s32.totalorder %s17, 4
      %s24 = sphi 0, %s36
      %s25 = sphi 0, %s32
      %s26 = sphi 0, %s24
      %s27 = sphi 0, %s25
      %s28 = sphi 0, %s26
      %s29 = sphi 0, %s27
      %s41 = sphi 0, %s43
      %s44 = sphi 0, %s41
      %s45 = sphi 0, %s44
      %s61 = sphi 0, %s45
      %s67 = sphi 0, %s69
      %s70 = sphi 0, %s67
      %s71 = sphi 0, %s70
      %s87 = sphi 0, %s71
      %s91 = sphi 0, %s91
      %s93 = sphi 0, %s91
      %s94 = sphi 0, %s93
      %s108 = sphi 0, %s94
      %s112 = sphi 0, %s112
      %s114 = sphi 0, %s112
      %s115 = sphi 0, %s114
      %s129 = sphi 0, %s115
      %s137 = sphi 0, %s139
      %s140 = sphi 0, %s137
      %s141 = sphi 0, %s140
      %s157 = sphi 0, %s141
    $region4: #{tpu_custom_call.1} parent=1 // loop_header_branch
      %20 = sbr.rel (%p18) target = $region8
    $region5: #{tpu_custom_call.1} parent=1 // loop_body
      %s22 = ssub.s32 %s17, 1
      %s23 = ssub.s32 %s17, 2
      %s30 = sadd.s32 1, %s25
      %p31 = scmp.ge.s32.totalorder %s30, 1
      %s32 = scalar_select %p31, 0, %s30
      %s33 = sadd.s32 1, %s24
      %s34 = scalar_select %p31, %s33, %s24
      %p35 = scmp.ge.s32.totalorder %s34, 2
      %s36 = scalar_select %p35, 0, %s34
      %s37 = ssub.s32 %s24, %s36
      %s38 = ssub.s32 %s25, %s32
      %s39 = sor.u32 %s37, %s38
      %p40 = scmp.eq.s32.totalorder %s39, 0
      %s42 = sadd.s32 %s41, 1
      %s43 = scalar_select %p40, %s41, %s42
      %p46 = pneg %p40
      %p47 = scmp.eq.s32.totalorder %s17, 1
      %p48 = por %p46, %p47
      %p49 = scmp.ne.s32.totalorder %s41, %s44
      %p50 = scmp.eq.s32.totalorder %s17, 0
      %p51 = por %p49, %p50
      %p52 = scmp.ne.s32.totalorder %s41, %s44
      %p53 = scmp.eq.s32.totalorder %s22, 1
      %p54 = por %p52, %p53
      %p55 = scmp.ne.s32.totalorder %s44, %s45
      %p56 = scmp.eq.s32.totalorder %s22, 0
      %p57 = por %p55, %p56
      %p58 = scmp.ne.s32.totalorder %s44, %s45
      %p59 = scmp.eq.s32.totalorder %s23, 1
      %p60 = por %p58, %p59
      %p62 = scmp.ne.s32.totalorder %s45, %s61
      %p63 = scmp.eq.s32.totalorder %s23, 0
      %p64 = por %p62, %p63
      %s65 = ssub.s32 %s25, %s32
      %p66 = scmp.eq.s32.totalorder %s65, 0
      %s68 = sadd.s32 %s67, 1
      %s69 = scalar_select %p66, %s67, %s68
      %p72 = pneg %p66
      %p73 = scmp.eq.s32.totalorder %s17, 1
      %p74 = por %p72, %p73
      %p75 = scmp.ne.s32.totalorder %s67, %s70
      %p76 = scmp.eq.s32.totalorder %s17, 0
      %p77 = por %p75, %p76
      %p78 = scmp.ne.s32.totalorder %s67, %s70
      %p79 = scmp.eq.s32.totalorder %s22, 1
      %p80 = por %p78, %p79
      %p81 = scmp.ne.s32.totalorder %s70, %s71
      %p82 = scmp.eq.s32.totalorder %s22, 0
      %p83 = por %p81, %p82
      %p84 = scmp.ne.s32.totalorder %s70, %s71
      %p85 = scmp.eq.s32.totalorder %s23, 1
      %p86 = por %p84, %p85
      %p88 = scmp.ne.s32.totalorder %s71, %s87
      %p89 = scmp.eq.s32.totalorder %s23, 0
      %p90 = por %p88, %p89
      %s92 = sadd.s32 %s91, 1
      %p95 = scmp.eq.s32.totalorder %s17, 1
      %p96 = scmp.ne.s32.totalorder %s91, %s93
      %p97 = scmp.eq.s32.totalorder %s17, 0
      %p98 = por %p96, %p97
      %p99 = scmp.ne.s32.totalorder %s91, %s93
      %p100 = scmp.eq.s32.totalorder %s22, 1
      %p101 = por %p99, %p100
      %p102 = scmp.ne.s32.totalorder %s93, %s94
      %p103 = scmp.eq.s32.totalorder %s22, 0
      %p104 = por %p102, %p103
      %p105 = scmp.ne.s32.totalorder %s93, %s94
      %p106 = scmp.eq.s32.totalorder %s23, 1
      %p107 = por %p105, %p106
      %p109 = scmp.ne.s32.totalorder %s94, %s108
      %p110 = scmp.eq.s32.totalorder %s23, 0
      %p111 = por %p109, %p110
      %s113 = sadd.s32 %s112, 1
      %p116 = scmp.eq.s32.totalorder %s17, 1
      %p117 = scmp.ne.s32.totalorder %s112, %s114
      %p118 = scmp.eq.s32.totalorder %s17, 0
      %p119 = por %p117, %p118
      %p120 = scmp.ne.s32.totalorder %s112, %s114
      %p121 = scmp.eq.s32.totalorder %s22, 1
      %p122 = por %p120, %p121
      %p123 = scmp.ne.s32.totalorder %s114, %s115
      %p124 = scmp.eq.s32.totalorder %s22, 0
      %p125 = por %p123, %p124
      %p126 = scmp.ne.s32.totalorder %s114, %s115
      %p127 = scmp.eq.s32.totalorder %s23, 1
      %p128 = por %p126, %p127
      %p130 = scmp.ne.s32.totalorder %s115, %s129
      %p131 = scmp.eq.s32.totalorder %s23, 0
      %p132 = por %p130, %p131
      %s133 = ssub.s32 %s24, %s36
      %s134 = ssub.s32 %s25, %s32
      %s135 = sor.u32 %s133, %s134
      %p136 = scmp.eq.s32.totalorder %s135, 0
      %s138 = sadd.s32 %s137, 1
      %s139 = scalar_select %p136, %s137, %s138
      %p142 = pneg %p136
      %p143 = scmp.eq.s32.totalorder %s17, 1
      %p144 = por %p142, %p143
      %p145 = scmp.ne.s32.totalorder %s137, %s140
      %p146 = scmp.eq.s32.totalorder %s17, 0
      %p147 = por %p145, %p146
      %p148 = scmp.ne.s32.totalorder %s137, %s140
      %p149 = scmp.eq.s32.totalorder %s22, 1
      %p150 = por %p148, %p149
      %p151 = scmp.ne.s32.totalorder %s140, %s141
      %p152 = scmp.eq.s32.totalorder %s22, 0
      %p153 = por %p151, %p152
      %p154 = scmp.ne.s32.totalorder %s140, %s141
      %p155 = scmp.eq.s32.totalorder %s23, 1
      %p156 = por %p154, %p155
      %p158 = scmp.ne.s32.totalorder %s141, %s157
      %p159 = scmp.eq.s32.totalorder %s23, 0
      %p160 = por %p158, %p159
      %p161 = scmp.le.s32.totalorder 1, %s17
      %p162 = scmp.lt.s32.totalorder %s17, 3
      %p163 = pnand %p161, %p162
      %p164 = pneg %p163
      // Predicated region
      $region9: #{tpu_custom_call.1} parent=5 // pred_check
        _
      $region10: #{tpu_custom_call.1} parent=5 // pred_check_branch
        %166 = sbr.rel (%p163) target = $region12
      $region11: #{tpu_custom_call.1} parent=5 // pred_region
        %s167 = ssub.s32 %s17, 1
        // Predicated region
        $region13: #{tpu_custom_call.1} parent=11 // pred_check
          %p168 = pneg %p83
        $region14: #{tpu_custom_call.1} parent=11 // pred_check_branch
          %170 = sbr.rel (%p168) target = $region16
        $region15: #{tpu_custom_call.1} parent=11 // pred_region
          %s172 = ssub.s32 128, 128
          %173 = vsyncadd [#allocation6], %s172
          %s174 = smul.addr %s27, 128
          %s175 = scalar_lea.hbm %s1, %s174
          %s177 = sshll.u32 [#allocation5], 4
          %s178 = int_to_ptr.vmem [resolvable:$true] %s177
          %180 = dma.hbm_to_vmem [thread:$0]  %s175, 128, %s178, [#allocation6]
        $region16: #{tpu_custom_call.1} parent=11 // pred_fallthru
          _
        // Predicated region
        $region17: #{tpu_custom_call.1} parent=11 // pred_check
          %p181 = pneg %p104
        $region18: #{tpu_custom_call.1} parent=11 // pred_check_branch
          %183 = sbr.rel (%p181) target = $region20
        $region19: #{tpu_custom_call.1} parent=11 // pred_region
          _
        $region20: #{tpu_custom_call.1} parent=11 // pred_fallthru
          _
        // Predicated region
        $region21: #{tpu_custom_call.1} parent=11 // pred_check
          %p184 = pneg %p125
        $region22: #{tpu_custom_call.1} parent=11 // pred_check_branch
          %186 = sbr.rel (%p184) target = $region24
        $region23: #{tpu_custom_call.1} parent=11 // pred_region
          _
        $region24: #{tpu_custom_call.1} parent=11 // pred_fallthru
          _
      $region12: #{tpu_custom_call.1} parent=5 // pred_fallthru
        _
      %p187 = scmp.lt.s32.totalorder %s17, 2
      // Predicated region
      $region25: #{tpu_custom_call.1} parent=5 // pred_check
        %p188 = pneg %p187
      $region26: #{tpu_custom_call.1} parent=5 // pred_check_branch
        %190 = sbr.rel (%p188) target = $region28
      $region27: #{tpu_custom_call.1} parent=5 // pred_region
        // Predicated region
        $region29: #{tpu_custom_call.1} parent=27 // pred_check
          %p191 = pneg %p51
        $region30: #{tpu_custom_call.1} parent=27 // pred_check_branch
          %193 = sbr.rel (%p191) target = $region32
        $region31: #{tpu_custom_call.1} parent=27 // pred_region
          %s194 = sand.u32 %s41, 1
          %s195 = scalar_lea.sflag [#allocation3], %s194
          %s196 = sand.u32 %s41, 1
          %s197 = smul.addr %s196, 8
          %s198 = scalar_lea.vmem [#allocation2], %s197
          %s200 = ssub.s32 128, 128
          %201 = vsyncadd %s195, %s200
          %s202 = sadd.s32 %s25, %s24
          %s203 = smul.addr %s202, 128
          %s204 = scalar_lea.hbm %s0, %s203
          %s206 = sshll.u32 %s198, 4
          %s207 = int_to_ptr.vmem [resolvable:$true] %s206
          %209 = dma.hbm_to_vmem [thread:$0]  %s204, 128, %s207, %s195
        $region32: #{tpu_custom_call.1} parent=27 // pred_fallthru
          _
      $region28: #{tpu_custom_call.1} parent=5 // pred_fallthru
        _
      %p210 = scmp.le.s32.totalorder 1, %s17
      %p211 = scmp.lt.s32.totalorder %s17, 3
      %p212 = pnand %p210, %p211
      %p213 = pneg %p212
      // Predicated region
      $region33: #{tpu_custom_call.1} parent=5 // pred_check
        _
      $region34: #{tpu_custom_call.1} parent=5 // pred_check_branch
        %215 = sbr.rel (%p212) target = $region36
      $region35: #{tpu_custom_call.1} parent=5 // pred_region
        %s216 = ssub.s32 %s17, 1
        %s217 = sand.u32 %s44, 1
        %s218 = scalar_lea.sflag [#allocation3], %s217
        %s219 = sand.u32 %s44, 1
        %s220 = smul.addr %s219, 8
        %s221 = scalar_lea.vmem [#allocation2], %s220
        // Predicated region
        $region37: #{tpu_custom_call.1} parent=35 // pred_check
          %p222 = pneg %p57
        $region38: #{tpu_custom_call.1} parent=35 // pred_check_branch
          %224 = sbr.rel (%p222) target = $region40
        $region39: #{tpu_custom_call.1} parent=35 // pred_region
          %225 = dma.done %s218, 128
        $region40: #{tpu_custom_call.1} parent=35 // pred_fallthru
          _
        // Predicated region
        $region41: #{tpu_custom_call.1} parent=35 // pred_check
          %p226 = pneg %p83
        $region42: #{tpu_custom_call.1} parent=35 // pred_check_branch
          %228 = sbr.rel (%p226) target = $region44
        $region43: #{tpu_custom_call.1} parent=35 // pred_region
          %229 = dma.done [#allocation6], 128
        $region44: #{tpu_custom_call.1} parent=35 // pred_fallthru
          _
        %s230 = sand.u32 %s44, 1
        %s231 = scalar_lea.sflag [#allocation3], %s230
        %s232 = sand.u32 %s44, 1
        %s233 = smul.addr %s232, 8
        %s234 = scalar_lea.vmem [#allocation2], %s233
        %p235 = pneg %p57
        %p236 = pneg %p54
        %p237 = pneg %p83
        %p238 = pneg %p80
        %p239 = pneg %p104
        %p240 = pneg %p101
        %p241 = pneg %p125
        %p242 = pneg %p122
        %p243 = pneg %p153
        %p244 = pneg %p150
        %s245 = sand.u32 %s140, 1
        %s246 = scalar_lea.sflag [#allocation4], %s245
        %s247 = sand.u32 %s140, 1
        %s248 = smul.addr %s247, 8
        %s249 = scalar_lea.vmem [#allocation7], %s248
        %v250 = vld [vmem:[%s221] sm:$0xff]
        %v251 = vld [vmem:[#allocation5] sm:$0xff]
        %v252 = vadd.f32 %v250, %v251
        %v253 = vld [vmem:[%s2] sm:$0x1]
        %v254 = vld [vmem:[%s3] sm:$0x1]
        %vm255 = vcmask 261120
        %v256 = vsel %vm255, %v252, 0.0
        %257 = vadd.xlane.f32.xlu0 %v256
        %v258 = vpop.xlane.xlu0 %257
        %v259 = vrcp.pop 32.0
        %v260 = vmul.f32 %v258, %v259
        %v261 = vsub.f32 %v252, %v260
        %v262 = vmul.f32 %v261, %v261
        %v263 = vsel %vm255, %v262, 0.0
        %264 = vadd.xlane.f32.xlu0 %v263
        %v265 = vpop.xlane.xlu0 %264
        %v266 = vmul.f32 %v265, %v259
        %v267 = vadd.f32 %v266, 1e-12
        %v268 = vrsqrt.pop %v267
        %v269 = vmul.f32 %v261, %v268
        %v271 = vlaneseq
        %v272 = vshrl.u32 %v271, 7
        %v273 = vsub.s32 0, %v272
        %v274 = vrot.slane %v253, %v273
        %v276 = vmul.f32 %v269, %v274
        %v278 = vlaneseq
        %v279 = vshrl.u32 %v278, 7
        %v280 = vsub.s32 0, %v279
        %v281 = vrot.slane %v254, %v280
        %v283 = vadd.f32 %v276, %v281
        %284 = vst.msk [vmem:[%s249] sm:$0xff] %vm255, %v283
        %s285 = sand.u32 %s140, 1
        %s286 = scalar_lea.sflag [#allocation4], %s285
        %s287 = sand.u32 %s140, 1
        %s288 = smul.addr %s287, 8
        %s289 = scalar_lea.vmem [#allocation7], %s288
        // Predicated region
        $region45: #{tpu_custom_call.1} parent=35 // pred_check
          %p290 = pneg %p150
        $region46: #{tpu_custom_call.1} parent=35 // pred_check_branch
          %292 = sbr.rel (%p290) target = $region48
        $region47: #{tpu_custom_call.1} parent=35 // pred_region
          %s294 = ssub.s32 128, 128
          %295 = vsyncadd %s286, %s294
          %s296 = sadd.s32 %s27, %s26
          %s297 = smul.addr %s296, 128
          %s298 = scalar_lea.hbm %s4, %s297
          %s300 = sshll.u32 %s289, 4
          %s301 = int_to_ptr.vmem [resolvable:$true] %s300
          %303 = dma.vmem_to_hbm [thread:$0]  %s301, 128, %s298, %s286
        $region48: #{tpu_custom_call.1} parent=35 // pred_fallthru
          _
      $region36: #{tpu_custom_call.1} parent=5 // pred_fallthru
        _
      %p304 = scmp.le.s32.totalorder 2, %s17
      // Predicated region
      $region49: #{tpu_custom_call.1} parent=5 // pred_check
        %p305 = pneg %p304
      $region50: #{tpu_custom_call.1} parent=5 // pred_check_branch
        %307 = sbr.rel (%p305) target = $region52
      $region51: #{tpu_custom_call.1} parent=5 // pred_region
        %s308 = ssub.s32 %s17, 2
        // Predicated region
        $region53: #{tpu_custom_call.1} parent=51 // pred_check
          %p309 = pneg %p156
        $region54: #{tpu_custom_call.1} parent=51 // pred_check_branch
          %311 = sbr.rel (%p309) target = $region56
        $region55: #{tpu_custom_call.1} parent=51 // pred_region
          %s312 = sand.u32 %s141, 1
          %s313 = scalar_lea.sflag [#allocation4], %s312
          %s314 = sand.u32 %s141, 1
          %s315 = smul.addr %s314, 8
          %s316 = scalar_lea.vmem [#allocation7], %s315
          %317 = dma.done %s313, 128
        $region56: #{tpu_custom_call.1} parent=51 // pred_fallthru
          _
      $region52: #{tpu_custom_call.1} parent=5 // pred_fallthru
        _
    $region6: #{tpu_custom_call.1} parent=1 // loop_footer
      %s21 = sadd.s32 1, %s17
    $region7: #{tpu_custom_call.1} parent=1 // loop_footer_branch
      %16 = sbr.rel target = $region3
    $region8: #{tpu_custom_call.1} parent=1 // loop_exit
      _
    %318 = vsyncpa [#allocation3], 1
    %s319 = scalar_lea.sflag [#allocation3], 1
    %320 = vsyncpa %s319, 1
    %321 = vsyncpa [#allocation6], 1
    %322 = vsyncpa [#allocation4], 1
    %s323 = scalar_lea.sflag [#allocation4], 1
    %324 = vsyncpa %s323, 1

</llo_original>
